<compile_context>
chip_gen: v6e
topology: v6e:2x2x1
jax: 0.10.0
libtpu: 0.0.40
codegen_flags: <defaults>
</compile_context>

<pallas_src>
import math

import jax
import jax.numpy as jnp
from jax.experimental import pallas as pl
from jax.experimental.pallas import tpu as pltpu

D_MODEL = 32
LN_EPS = 1e-5          # torch.nn.LayerNorm default eps


# ----------------------- in-kernel math helpers ------------------------------
def _erf(x):
    # Abramowitz & Stegun 7.1.26 polynomial, |abs err| < 1.5e-7.
    # Used so the kernel matches PyTorch's exact (erf-based) nn.GELU() default.
    a1, a2, a3, a4, a5 = 0.254829592, -0.284496736, 1.421413741, -1.453152027, 1.061405429
    p = 0.3275911
    ax = jnp.abs(x)
    t = 1.0 / (1.0 + p * ax)
    poly = ((((a5 * t + a4) * t + a3) * t + a2) * t + a1) * t
    y = 1.0 - poly * jnp.exp(-ax * ax)
    return jnp.where(x >= 0.0, y, -y)


def _gelu_exact(x):
    # PyTorch nn.GELU() default (erf-based, approximate='none')
    return 0.5 * x * (1.0 + _erf(x * (1.0 / math.sqrt(2.0))))


# ----------------------- fused kernel -----------------------------------------
def lifting_kernel(x_ref, w_ref, b_ref, g_ref, beta_ref, o_ref):
    """Linear -> GELU -> LayerNorm, fully fused for one (tm, D) row tile."""
    # Linear (MXU, f32 accumulation)
    h = jnp.dot(x_ref[...], w_ref[...], preferred_element_type=jnp.float32)
    h = h + b_ref[...]
    # Exact (erf-based) GELU
    h = _gelu_exact(h)
    # LayerNorm over the feature (lane) axis
    mu = jnp.mean(h, axis=-1, keepdims=True)
    var = jnp.mean(jnp.square(h - mu), axis=-1, keepdims=True)
    o_ref[...] = (h - mu) * jax.lax.rsqrt(var + LN_EPS) * g_ref[...] + beta_ref[...]


# ----------------------- host-side wrapper ------------------------------------
def lifting_forward(x, params, *, block_rows=512, cast_bf16=False):
    """Apply LiftingNet to x of shape (..., d_model)."""
    w, b, g, beta = params["w"], params["b"], params["g"], params["beta"]
    d = w.shape[0]
    lead = x.shape[:-1]
    x2 = x.reshape(-1, d).astype(jnp.float32)
    n = x2.shape[0]

    # Row tiling: pad rows to a sublane multiple (8); each grid step processes
    # one lane-dense (tm, d) slab. block_rows must stay a multiple of 8.
    n8 = ((n + 7) // 8) * 8
    tm = n8 if n8 <= block_rows else block_rows
    n_pad = ((n8 + tm - 1) // tm) * tm
    if n_pad != n:
        x2 = jnp.pad(x2, ((0, n_pad - n), (0, 0)))

    if cast_bf16:
        # bf16 operands, f32 accumulation (recommended when d_model is large).
        x2 = x2.astype(jnp.bfloat16)
        w = w.astype(jnp.bfloat16)

    grid = (n_pad // tm,)
    out = pl.pallas_call(
        lifting_kernel,
        grid=grid,
        in_specs=[
            pl.BlockSpec((tm, d), lambda i: (i, 0)),   # activations: row tile i
            pl.BlockSpec((d, d), lambda i: (0, 0)),    # weight (broadcast)
            pl.BlockSpec((1, d), lambda i: (0, 0)),    # bias
            pl.BlockSpec((1, d), lambda i: (0, 0)),    # LN gamma
            pl.BlockSpec((1, d), lambda i: (0, 0)),    # LN beta
        ],
        out_specs=pl.BlockSpec((tm, d), lambda i: (i, 0)),
        out_shape=jax.ShapeDtypeStruct((n_pad, d), jnp.float32),
        compiler_params=pltpu.CompilerParams(
            dimension_semantics=("parallel",)),        # v7x: shard rows over 2 TCs
    )(x2, w, b, g, beta)

    if n_pad != n:
        out = out[:n]
    return out.reshape(*lead, d)


# ----------------------- pure-JAX reference (for self-check) ------------------
def lifting_reference(x, params):
    h = x.astype(jnp.float32) @ params["w"] + params["b"]
    h = jax.nn.gelu(h, approximate=False)
    mu = jnp.mean(h, axis=-1, keepdims=True)
    var = jnp.mean(jnp.square(h - mu), axis=-1, keepdims=True)
    return (h - mu) * jax.lax.rsqrt(var + LN_EPS) * params["g"] + params["beta"]


# ----------------------- deterministic parameter init -------------------------
def init_params(key, d_model):
    # Matches torch.nn.Linear default init; weight stored as (in, out),
    # i.e. already transposed relative to torch's (out, in).
    k1, k2 = jax.random.split(key)
    lim = 1.0 / math.sqrt(d_model)
    return {
        "w": jax.random.uniform(k1, (d_model, d_model), jnp.float32, -lim, lim),
        "b": jax.random.uniform(k2, (1, d_model), jnp.float32, -lim, lim),
        "g": jnp.ones((1, d_model), jnp.float32),       # LayerNorm weight
        "beta": jnp.zeros((1, d_model), jnp.float32),   # LayerNorm bias
    }


# ----------------------- main --------------------------------------------------
if __name__ == "__main__":
    B, S, D = 2, 8, D_MODEL
    key = jax.random.PRNGKey(0)
    k_x, k_p = jax.random.split(key)
    x = jax.random.normal(k_x, (B, S, D), dtype=jnp.float32)
    params = init_params(k_p, D)

    out = lifting_forward(x, params)
    out = jax.block_until_ready(out)

    assert out.shape == (B, S, D)
    assert bool(jnp.all(jnp.isfinite(out)))

    ref = lifting_reference(x, params)
    max_err = float(jnp.max(jnp.abs(out - ref)))
    # erf polynomial is accurate to ~1.5e-7; 1e-4 is a comfortable bound.
    assert max_err < 1e-4, f"max abs error vs reference = {max_err}"

    print("KERNEL_OK")
</pallas_src>

<mosaic_0001>
module attributes {stable_mosaic.version = 11 : i64} {
  func.func @lifting_kernel(%arg0: i32, %arg1: memref<16x32xf32, #tpu.memory_space<vmem>>, %arg2: memref<32x32xf32, #tpu.memory_space<vmem>>, %arg3: memref<1x32xf32, #tpu.memory_space<vmem>>, %arg4: memref<1x32xf32, #tpu.memory_space<vmem>>, %arg5: memref<1x32xf32, #tpu.memory_space<vmem>>, %arg6: memref<16x32xf32, #tpu.memory_space<vmem>>) attributes {dimension_semantics = [#tpu.dimension_semantics<parallel>], iteration_bounds = array<i64: 1>, scalar_prefetch = 0 : i64, scratch_operands = 0 : i64, tpu.core_type = #tpu.core_type<tc>, window_params = [{transform_indices = @transform_0, window_bounds = array<i64: 16, 32>}, {pipeline_mode = #tpu.pipeline_mode<synchronous>, transform_indices = @transform_1, window_bounds = array<i64: 32, 32>}, {pipeline_mode = #tpu.pipeline_mode<synchronous>, transform_indices = @transform_2, window_bounds = array<i64: 1, 32>}, {pipeline_mode = #tpu.pipeline_mode<synchronous>, transform_indices = @transform_3, window_bounds = array<i64: 1, 32>}, {pipeline_mode = #tpu.pipeline_mode<synchronous>, transform_indices = @transform_4, window_bounds = array<i64: 1, 32>}, {transform_indices = @transform_5, window_bounds = array<i64: 16, 32>}]} {
    %c0 = arith.constant 0 : index
    %c0_0 = arith.constant 0 : index
    %0 = vector.load %arg1[%c0, %c0_0] : memref<16x32xf32, #tpu.memory_space<vmem>>, vector<16x32xf32>
    %c0_1 = arith.constant 0 : index
    %c0_2 = arith.constant 0 : index
    %1 = vector.load %arg2[%c0_1, %c0_2] : memref<32x32xf32, #tpu.memory_space<vmem>>, vector<32x32xf32>
    %cst = arith.constant dense<0.000000e+00> : vector<16x32xf32>
    %2 = tpu.matmul %0, %1, %cst {dimension_numbers = #tpu.dot_dimension_numbers<[1], [0], [0], [1], [0, 0, 1, 1], [], []>} : vector<16x32xf32>, vector<32x32xf32>, vector<16x32xf32> -> vector<16x32xf32>
    %c0_3 = arith.constant 0 : index
    %c0_4 = arith.constant 0 : index
    %3 = vector.load %arg3[%c0_3, %c0_4] : memref<1x32xf32, #tpu.memory_space<vmem>>, vector<1x32xf32>
    %4 = vector.broadcast %3 : vector<1x32xf32> to vector<16x32xf32>
    %5 = arith.addf %2, %4 : vector<16x32xf32>
    %cst_5 = arith.constant 5.000000e-01 : f32
    %6 = vector.broadcast %cst_5 : f32 to vector<16x32xf32>
    %7 = arith.mulf %6, %5 : vector<16x32xf32>
    %cst_6 = arith.constant 0.707106769 : f32
    %8 = vector.broadcast %cst_6 : f32 to vector<16x32xf32>
    %9 = arith.mulf %5, %8 : vector<16x32xf32>
    %10 = math.absf %9 : vector<16x32xf32>
    %cst_7 = arith.constant 0.327591091 : f32
    %11 = vector.broadcast %cst_7 : f32 to vector<16x32xf32>
    %12 = arith.mulf %11, %10 : vector<16x32xf32>
    %cst_8 = arith.constant 1.000000e+00 : f32
    %13 = vector.broadcast %cst_8 : f32 to vector<16x32xf32>
    %14 = arith.addf %13, %12 : vector<16x32xf32>
    %cst_9 = arith.constant 1.000000e+00 : f32
    %15 = vector.broadcast %cst_9 : f32 to vector<16x32xf32>
    %16 = arith.divf %15, %14 : vector<16x32xf32>
    %cst_10 = arith.constant 1.06140542 : f32
    %17 = vector.broadcast %cst_10 : f32 to vector<16x32xf32>
    %18 = arith.mulf %17, %16 : vector<16x32xf32>
    %cst_11 = arith.constant -1.45315206 : f32
    %19 = vector.broadcast %cst_11 : f32 to vector<16x32xf32>
    %20 = arith.addf %18, %19 : vector<16x32xf32>
    %21 = arith.mulf %20, %16 : vector<16x32xf32>
    %cst_12 = arith.constant 1.42141378 : f32
    %22 = vector.broadcast %cst_12 : f32 to vector<16x32xf32>
    %23 = arith.addf %21, %22 : vector<16x32xf32>
    %24 = arith.mulf %23, %16 : vector<16x32xf32>
    %cst_13 = arith.constant -0.284496725 : f32
    %25 = vector.broadcast %cst_13 : f32 to vector<16x32xf32>
    %26 = arith.addf %24, %25 : vector<16x32xf32>
    %27 = arith.mulf %26, %16 : vector<16x32xf32>
    %cst_14 = arith.constant 0.254829586 : f32
    %28 = vector.broadcast %cst_14 : f32 to vector<16x32xf32>
    %29 = arith.addf %27, %28 : vector<16x32xf32>
    %30 = arith.mulf %29, %16 : vector<16x32xf32>
    %cst_15 = arith.constant 0.000000e+00 : f32
    %31 = vector.broadcast %cst_15 : f32 to vector<16x32xf32>
    %32 = arith.subf %31, %10 : vector<16x32xf32>
    %33 = arith.mulf %32, %10 : vector<16x32xf32>
    %34 = math.exp %33 : vector<16x32xf32>
    %35 = arith.mulf %30, %34 : vector<16x32xf32>
    %cst_16 = arith.constant 1.000000e+00 : f32
    %36 = vector.broadcast %cst_16 : f32 to vector<16x32xf32>
    %37 = arith.subf %36, %35 : vector<16x32xf32>
    %cst_17 = arith.constant 0.000000e+00 : f32
    %38 = vector.broadcast %cst_17 : f32 to vector<16x32xf32>
    %39 = arith.cmpf oge, %9, %38 : vector<16x32xf32>
    %cst_18 = arith.constant 0.000000e+00 : f32
    %40 = vector.broadcast %cst_18 : f32 to vector<16x32xf32>
    %41 = arith.subf %40, %37 : vector<16x32xf32>
    %42 = arith.select %39, %37, %41 : vector<16x32xi1>, vector<16x32xf32>
    %cst_19 = arith.constant 1.000000e+00 : f32
    %43 = vector.broadcast %cst_19 : f32 to vector<16x32xf32>
    %44 = arith.addf %43, %42 : vector<16x32xf32>
    %45 = arith.mulf %7, %44 : vector<16x32xf32>
    %cst_20 = arith.constant dense<0.000000e+00> : vector<16xf32>
    %46 = vector.multi_reduction <add>, %45, %cst_20 [1] : vector<16x32xf32> to vector<16xf32>
    %47 = vector.shape_cast %46 : vector<16xf32> to vector<16x1xf32>
    %cst_21 = arith.constant 3.200000e+01 : f32
    %48 = vector.broadcast %cst_21 : f32 to vector<16x1xf32>
    %49 = arith.divf %47, %48 : vector<16x1xf32>
    %50 = vector.broadcast %49 : vector<16x1xf32> to vector<16x32xf32>
    %51 = arith.subf %45, %50 : vector<16x32xf32>
    %52 = arith.mulf %51, %51 : vector<16x32xf32>
    %cst_22 = arith.constant dense<0.000000e+00> : vector<16xf32>
    %53 = vector.multi_reduction <add>, %52, %cst_22 [1] : vector<16x32xf32> to vector<16xf32>
    %54 = vector.shape_cast %53 : vector<16xf32> to vector<16x1xf32>
    %cst_23 = arith.constant 3.200000e+01 : f32
    %55 = vector.broadcast %cst_23 : f32 to vector<16x1xf32>
    %56 = arith.divf %54, %55 : vector<16x1xf32>
    %57 = vector.broadcast %49 : vector<16x1xf32> to vector<16x32xf32>
    %58 = arith.subf %45, %57 : vector<16x32xf32>
    %cst_24 = arith.constant 9.99999974E-6 : f32
    %59 = vector.broadcast %cst_24 : f32 to vector<16x1xf32>
    %60 = arith.addf %56, %59 : vector<16x1xf32>
    %61 = math.rsqrt %60 : vector<16x1xf32>
    %62 = vector.broadcast %61 : vector<16x1xf32> to vector<16x32xf32>
    %63 = arith.mulf %58, %62 : vector<16x32xf32>
    %c0_25 = arith.constant 0 : index
    %c0_26 = arith.constant 0 : index
    %64 = vector.load %arg4[%c0_25, %c0_26] : memref<1x32xf32, #tpu.memory_space<vmem>>, vector<1x32xf32>
    %65 = vector.broadcast %64 : vector<1x32xf32> to vector<16x32xf32>
    %66 = arith.mulf %63, %65 : vector<16x32xf32>
    %c0_27 = arith.constant 0 : index
    %c0_28 = arith.constant 0 : index
    %67 = vector.load %arg5[%c0_27, %c0_28] : memref<1x32xf32, #tpu.memory_space<vmem>>, vector<1x32xf32>
    %68 = vector.broadcast %67 : vector<1x32xf32> to vector<16x32xf32>
    %69 = arith.addf %66, %68 : vector<16x32xf32>
    %c0_29 = arith.constant 0 : index
    %c0_30 = arith.constant 0 : index
    %70 = vector.load %arg6[%c0_29, %c0_30] : memref<16x32xf32, #tpu.memory_space<vmem>>, vector<16x32xf32>
    tpu.vector_store %arg6[%c0_29, %c0_30], %69 {strides = array<i32>} : memref<16x32xf32, #tpu.memory_space<vmem>>, vector<16x32xf32>,
    return
  }
  func.func @transform_0(%arg0: i32) -> (i32, i32) {
    %c0_i32 = arith.constant 0 : i32
    %c0_i32_0 = arith.constant 0 : i32
    return %arg0, %c0_i32 : i32, i32
  }
  func.func @transform_1(%arg0: i32) -> (i32, i32) {
    %c0_i32 = arith.constant 0 : i32
    %c0_i32_0 = arith.constant 0 : i32
    %c0_i32_1 = arith.constant 0 : i32
    return %c0_i32, %c0_i32_0 : i32, i32
  }
  func.func @transform_2(%arg0: i32) -> (i32, i32) {
    %c0_i32 = arith.constant 0 : i32
    %c0_i32_0 = arith.constant 0 : i32
    %c0_i32_1 = arith.constant 0 : i32
    return %c0_i32, %c0_i32_0 : i32, i32
  }
  func.func @transform_3(%arg0: i32) -> (i32, i32) {
    %c0_i32 = arith.constant 0 : i32
    %c0_i32_0 = arith.constant 0 : i32
    %c0_i32_1 = arith.constant 0 : i32
    return %c0_i32, %c0_i32_0 : i32, i32
  }
  func.func @transform_4(%arg0: i32) -> (i32, i32) {
    %c0_i32 = arith.constant 0 : i32
    %c0_i32_0 = arith.constant 0 : i32
    %c0_i32_1 = arith.constant 0 : i32
    return %c0_i32, %c0_i32_0 : i32, i32
  }
  func.func @transform_5(%arg0: i32) -> (i32, i32) {
    %c0_i32 = arith.constant 0 : i32
    %c0_i32_0 = arith.constant 0 : i32
    return %arg0, %c0_i32 : i32, i32
  }
}

</mosaic_0001>

<llo_original>
// kernel: tpu_custom_call.1
$region0: #{tpu_custom_call.1}
  #allocation0 [shape = 'u32[]', space=smem, size = 0x4, offset = 0x4, fixed_abs, tag = 'smem constant byte address 0x4 - core index']
  #allocation1 [shape = 'u32[144,128]{1,0:T(1,128)}', space=vmem, size = 0x12000, scoped, tag = 'internal scratch']
  %s0 = inlined_call_operand.hbm [shape: f32[16,32], index: 0, kind: input, shape index: {}]
  %s1 = inlined_call_operand.hbm [shape: f32[32,32], index: 1, kind: input, shape index: {}]
  %s2 = inlined_call_operand.vmem [shape: f32[1,32], index: 2, kind: input, shape index: {}]
  %s3 = inlined_call_operand.vmem [shape: f32[1,32], index: 3, kind: input, shape index: {}]
  %s4 = inlined_call_operand.vmem [shape: f32[1,32], index: 4, kind: input, shape index: {}]
  %s5 = inlined_call_operand.hbm [shape: f32[16,32], index: 5, kind: output, shape index: {}]
  %s6 = sld [smem:[#allocation0]]
  $region38: #{tpu_custom_call.1} parent=0
    _
  %s8 = ssub.s32 1, %s6
  %s9 = scalar_select 0, %s8, %s6
  $region1: #{tpu_custom_call.1} parent=0
    #allocation2 [shape = 'u8[8192]{0}', space=vmem, size = 0x2000, scoped, tag = 'input window, operand 0, single buffered']
    #allocation3 [shape = 's32[1]{0}', space=sflag, size = 0x4, scoped, tag = 'scoped memory for tpu_custom_call.1']
    #allocation4 [shape = 's32[1]{0}', space=sflag, size = 0x4, scoped, tag = 'scoped memory for tpu_custom_call.1']
    #allocation5 [shape = 'u8[16384]{0}', space=vmem, size = 0x4000, scoped, tag = 'input window, operand 1, single buffered']
    #allocation6 [shape = 's32[1]{0}', space=sflag, size = 0x4, scoped, tag = 'scoped memory for tpu_custom_call.1']
    #allocation7 [shape = 'u8[8192]{0}', space=vmem, size = 0x2000, scoped, tag = 'output window, operand 0, single buffered']
    %10 = vsyncpa [#allocation3], 0
    %11 = vsyncpa [#allocation6], 0
    %12 = vsyncpa [#allocation4], 0
    // Predicated region
    $region2: #{tpu_custom_call.1} parent=1 // pred_check
      _
    $region3: #{tpu_custom_call.1} parent=1 // pred_check_branch
      %14 = sbr.rel (0) target = $region5
    $region4: #{tpu_custom_call.1} parent=1 // pred_region
      %s16 = ssub.s32 256, 256
      %17 = vsyncadd [#allocation3], %s16
      %s18 = sshll.u32 [#allocation2], 4
      %s19 = int_to_ptr.vmem [resolvable:$true] %s18
      %24 = dma.hbm_to_vmem [thread:$0]  %s0, 256, %s19, [#allocation3], 128, 128, 8
    $region5: #{tpu_custom_call.1} parent=1 // pred_fallthru
      _
    // Predicated region
    $region6: #{tpu_custom_call.1} parent=1 // pred_check
      _
    $region7: #{tpu_custom_call.1} parent=1 // pred_check_branch
      %26 = sbr.rel (0) target = $region9
    $region8: #{tpu_custom_call.1} parent=1 // pred_region
      %s28 = ssub.s32 512, 512
      %29 = vsyncadd [#allocation6], %s28
      %s30 = sshll.u32 [#allocation5], 4
      %s31 = int_to_ptr.vmem [resolvable:$true] %s30
      %36 = dma.hbm_to_vmem [thread:$0]  %s1, 512, %s31, [#allocation6], 128, 128, 8
    $region9: #{tpu_custom_call.1} parent=1 // pred_fallthru
      _
    // Predicated region
    $region10: #{tpu_custom_call.1} parent=1 // pred_check
      _
    $region11: #{tpu_custom_call.1} parent=1 // pred_check_branch
      %38 = sbr.rel (0) target = $region13
    $region12: #{tpu_custom_call.1} parent=1 // pred_region
      _
    $region13: #{tpu_custom_call.1} parent=1 // pred_fallthru
      _
    // Predicated region
    $region14: #{tpu_custom_call.1} parent=1 // pred_check
      _
    $region15: #{tpu_custom_call.1} parent=1 // pred_check_branch
      %40 = sbr.rel (0) target = $region17
    $region16: #{tpu_custom_call.1} parent=1 // pred_region
      _
    $region17: #{tpu_custom_call.1} parent=1 // pred_fallthru
      _
    // Predicated region
    $region18: #{tpu_custom_call.1} parent=1 // pred_check
      _
    $region19: #{tpu_custom_call.1} parent=1 // pred_check_branch
      %42 = sbr.rel (0) target = $region21
    $region20: #{tpu_custom_call.1} parent=1 // pred_region
      _
    $region21: #{tpu_custom_call.1} parent=1 // pred_fallthru
      _
    // Predicated region
    $region22: #{tpu_custom_call.1} parent=1 // pred_check
      _
    $region23: #{tpu_custom_call.1} parent=1 // pred_check_branch
      %44 = sbr.rel (0) target = $region25
    $region24: #{tpu_custom_call.1} parent=1 // pred_region
      %45 = dma.done [#allocation3], 256
    $region25: #{tpu_custom_call.1} parent=1 // pred_fallthru
      _
    // Predicated region
    $region26: #{tpu_custom_call.1} parent=1 // pred_check
      _
    $region27: #{tpu_custom_call.1} parent=1 // pred_check_branch
      %47 = sbr.rel (0) target = $region29
    $region28: #{tpu_custom_call.1} parent=1 // pred_region
      %48 = dma.done [#allocation6], 512
    $region29: #{tpu_custom_call.1} parent=1 // pred_fallthru
      _
    %v49 = vld [vmem:[#allocation2] sm:$0xff]
    %v50 = vld [vmem:[#allocation2 + $0x8] sm:$0xff]
    %v51 = vld [vmem:[#allocation5] sm:$0xff]
    %v52 = vld [vmem:[#allocation5 + $0x8] sm:$0xff]
    %v53 = vld [vmem:[#allocation5 + $0x10] sm:$0xff]
    %v54 = vld [vmem:[#allocation5 + $0x18] sm:$0xff]
    %v55 = vld [vmem:[%s2] sm:$0x1]
    %v57 = vlaneseq
    %v58 = vshrl.u32 %v57, 7
    %v59 = vsub.s32 0, %v58
    %v60 = vrot.slane %v55, %v59
    %vm62 = vcmask 261120
    %v64 = vsel %vm62, %v49, 0
    %v67 = vsel %vm62, %v50, 0
    %69 = vmatprep.subr.mxu0 0.0
    %70 = vmatpush1.msra.mxu0 0.0
    %71 = vmatprep.subr.mxu0 0.0
    %72 = vmatpush1.msra.mxu0 0.0
    %73 = vmatprep.subr.mxu0 0.0
    %74 = vmatpush1.msra.mxu0 0.0
    %75 = vmatprep.subr.mxu0 0.0
    %76 = vmatpush1.msra.mxu0 0.0
    %77 = vmatprep.subr.mxu0 0.0
    %78 = vmatpush1.msra.mxu0 0.0
    %79 = vmatprep.subr.mxu0 0.0
    %80 = vmatpush1.msra.mxu0 0.0
    %81 = vmatprep.subr.mxu0 0.0
    %82 = vmatpush1.msra.mxu0 0.0
    %83 = vmatprep.subr.mxu0 0.0
    %84 = vmatpush1.msra.mxu0 0.0
    %85 = vmatprep.subr.mxu0 0.0
    %86 = vmatpush1.msra.mxu0 0.0
    %87 = vmatprep.subr.mxu0 0.0
    %88 = vmatpush1.msra.mxu0 0.0
    %89 = vmatprep.subr.mxu0 0.0
    %90 = vmatpush1.msra.mxu0 0.0
    %91 = vmatprep.subr.mxu0 0.0
    %92 = vmatpush1.msra.mxu0 0.0
    %93 = vmatprep.subr.mxu0 0.0
    %94 = vmatpush1.msra.mxu0 %v54
    %95 = vmatprep.subr.mxu0 0.0
    %96 = vmatpush1.msra.mxu0 %v53
    %97 = vmatprep.subr.mxu0 0.0
    %98 = vmatpush1.msra.mxu0 %v52
    %99 = vmatprep.subr.mxu0 0.0
    %100 = vmatpush1.msra.mxu0 %v51
    %101 = vmatprep.subr.mxu0 0.0
    %102 = vmatpush2.msra.mxu0 0.0
    %103 = vmatprep.subr.mxu0 0.0
    %104 = vmatpush2.msra.mxu0 0.0
    %105 = vmatprep.subr.mxu0 0.0
    %106 = vmatpush2.msra.mxu0 0.0
    %107 = vmatprep.subr.mxu0 0.0
    %108 = vmatpush2.msra.mxu0 0.0
    %109 = vmatprep.subr.mxu0 0.0
    %110 = vmatpush2.msra.mxu0 0.0
    %111 = vmatprep.subr.mxu0 0.0
    %112 = vmatpush2.msra.mxu0 0.0
    %113 = vmatprep.subr.mxu0 0.0
    %114 = vmatpush2.msra.mxu0 0.0
    %115 = vmatprep.subr.mxu0 0.0
    %116 = vmatpush2.msra.mxu0 0.0
    %117 = vmatprep.subr.mxu0 0.0
    %118 = vmatpush2.msra.mxu0 0.0
    %119 = vmatprep.subr.mxu0 0.0
    %120 = vmatpush2.msra.mxu0 0.0
    %121 = vmatprep.subr.mxu0 0.0
    %122 = vmatpush2.msra.mxu0 0.0
    %123 = vmatprep.subr.mxu0 0.0
    %124 = vmatpush2.msra.mxu0 0.0
    %125 = vmatprep.subr.mxu0 0.0
    %126 = vmatpush2.msra.mxu0 0.0
    %127 = vmatprep.subr.mxu0 0.0
    %128 = vmatpush2.msra.mxu0 0.0
    %129 = vmatprep.subr.mxu0 0.0
    %130 = vmatpush2.msra.mxu0 0.0
    %131 = vmatprep.subr.mxu0 0.0
    %132 = vmatpush2.msra.mxu0 0.0
    %133 = vmatprep.mubr.f32.mxu0 0.0
    %134 = vmatmul.mubr.f32.gmra.mxu0 %v64
    %v135 = vpop.f32.mrf.mxu0
    %v136 = vadd.f32 %v60, %v135
    %v137 = vpop.f32.mrf.mxu0
    %138 = vmatprep.mubr.f32.mxu0 0.0
    %139 = vmatmul.mubr.f32.gmra.mxu0 %v67
    %v140 = vpop.f32.mrf.mxu0
    %v141 = vadd.f32 %v60, %v140
    %v142 = vpop.f32.mrf.mxu0
    %143 = vdwg.mxu0
    %v144 = vmul.f32 %v136, 0.5
    %v145 = vmul.f32 %v141, 0.5
    %v146 = vmul.f32 %v136, 0.70710677
    %v147 = vmul.f32 %v141, 0.70710677
    %v148 = vand.u32 2147483647, %v146
    %v149 = vand.u32 2147483647, %v147
    %v150 = vmul.f32 %v148, 0.3275911
    %v151 = vmul.f32 %v149, 0.3275911
    %v152 = vadd.f32 %v150, 1.0
    %v153 = vadd.f32 %v151, 1.0
    %v154 = vrcp.pop %v152
    %v155 = vmul.f32 1.0, %v154
    %v156 = vrcp.pop %v153
    %v157 = vmul.f32 1.0, %v156
    %v158 = vmul.f32 %v155, 1.0614054
    %v159 = vmul.f32 %v157, 1.0614054
    %v160 = vadd.f32 %v158, -1.4531521
    %v161 = vadd.f32 %v159, -1.4531521
    %v162 = vmul.f32 %v160, %v155
    %v163 = vmul.f32 %v161, %v157
    %v164 = vadd.f32 %v162, 1.4214138
    %v165 = vadd.f32 %v163, 1.4214138
    %v166 = vmul.f32 %v164, %v155
    %v167 = vmul.f32 %v165, %v157
    %v168 = vadd.f32 %v166, -0.28449672
    %v169 = vadd.f32 %v167, -0.28449672
    %v170 = vmul.f32 %v168, %v155
    %v171 = vmul.f32 %v169, %v157
    %v172 = vadd.f32 %v170, 0.2548296
    %v173 = vadd.f32 %v171, 0.2548296
    %v174 = vmul.f32 %v172, %v155
    %v175 = vmul.f32 %v173, %v157
    %v176 = vsub.f32 0.0, %v148
    %v177 = vsub.f32 0.0, %v149
    %v178 = vmul.f32 %v176, %v148
    %v179 = vmul.f32 %v177, %v149
    %v180 = vmul.f32 %v178, 1.442695
    %v181 = vpow.pop %v180
    %v182 = vmul.f32 %v179, 1.442695
    %v183 = vpow.pop %v182
    %v184 = vmul.f32 %v174, %v181
    %v185 = vmul.f32 %v175, %v183
    %v186 = vsub.f32 1.0, %v184
    %v187 = vsub.f32 1.0, %v185
    %vm188 = vcmp.ge.f32.partialorder %v146, 0.0
    %vm189 = vcmp.ge.f32.partialorder %v147, 0.0
    %v190 = vsub.f32 0.0, %v186
    %v191 = vsub.f32 0.0, %v187
    %v192 = vsel %vm188, %v186, %v190
    %v193 = vsel %vm189, %v187, %v191
    %v194 = vadd.f32 %v192, 1.0
    %v195 = vadd.f32 %v193, 1.0
    %v196 = vmul.f32 %v144, %v194
    %v197 = vmul.f32 %v145, %v195
    %v198 = vsel %vm62, %v196, 0.0
    %199 = vadd.xlane.f32.xlu0 %v198
    %v200 = vpop.xlane.xlu0 %199
    %v201 = vsel %vm62, %v197, 0.0
    %202 = vadd.xlane.f32.xlu0 %v201
    %v203 = vpop.xlane.xlu0 %202
    %v204 = vrcp.pop 32.0
    %v205 = vmul.f32 %v200, %v204
    %v206 = vmul.f32 %v203, %v204
    %v207 = vsub.f32 %v196, %v205
    %v208 = vsub.f32 %v197, %v206
    %v209 = vmul.f32 %v207, %v207
    %v210 = vmul.f32 %v208, %v208
    %v211 = vsel %vm62, %v209, 0.0
    %212 = vadd.xlane.f32.xlu0 %v211
    %v213 = vpop.xlane.xlu0 %212
    %v214 = vsel %vm62, %v210, 0.0
    %215 = vadd.xlane.f32.xlu0 %v214
    %v216 = vpop.xlane.xlu0 %215
    %v217 = vmul.f32 %v213, %v204
    %v218 = vmul.f32 %v216, %v204
    %v219 = vadd.f32 %v217, 1e-05
    %v220 = vadd.f32 %v218, 1e-05
    %v221 = vrsqrt.pop %v219
    %v222 = vrsqrt.pop %v220
    %v223 = vmul.f32 %v207, %v221
    %v224 = vmul.f32 %v208, %v222
    %v225 = vld [vmem:[%s3] sm:$0x1]
    %v227 = vlaneseq
    %v228 = vshrl.u32 %v227, 7
    %v229 = vsub.s32 0, %v228
    %v230 = vrot.slane %v225, %v229
    %v232 = vmul.f32 %v223, %v230
    %v233 = vmul.f32 %v224, %v230
    %v234 = vld [vmem:[%s4] sm:$0x1]
    %v236 = vlaneseq
    %v237 = vshrl.u32 %v236, 7
    %v238 = vsub.s32 0, %v237
    %v239 = vrot.slane %v234, %v238
    %v241 = vadd.f32 %v232, %v239
    %v242 = vadd.f32 %v233, %v239
    %243 = vst.msk [vmem:[#allocation7] sm:$0xff] %vm62, %v241
    %244 = vst.msk [vmem:[#allocation7 + $0x8] sm:$0xff] %vm62, %v242
    // Predicated region
    $region30: #{tpu_custom_call.1} parent=1 // pred_check
      _
    $region31: #{tpu_custom_call.1} parent=1 // pred_check_branch
      %246 = sbr.rel (0) target = $region33
    $region32: #{tpu_custom_call.1} parent=1 // pred_region
      %s248 = ssub.s32 256, 256
      %249 = vsyncadd [#allocation4], %s248
      %s250 = sshll.u32 [#allocation7], 4
      %s251 = int_to_ptr.vmem [resolvable:$true] %s250
      %256 = dma.vmem_to_hbm [thread:$0]  %s251, 256, %s5, [#allocation4], 128, 128, 8
    $region33: #{tpu_custom_call.1} parent=1 // pred_fallthru
      _
    // Predicated region
    $region34: #{tpu_custom_call.1} parent=1 // pred_check
      _
    $region35: #{tpu_custom_call.1} parent=1 // pred_check_branch
      %258 = sbr.rel (0) target = $region37
    $region36: #{tpu_custom_call.1} parent=1 // pred_region
      %259 = dma.done [#allocation4], 256
    $region37: #{tpu_custom_call.1} parent=1 // pred_fallthru
      _
    %260 = vsyncpa [#allocation3], 1
    %261 = vsyncpa [#allocation6], 1
    %262 = vsyncpa [#allocation4], 1

</llo_original>
